<compile_context>
chip_gen: v7x
topology: tpu7x:2x2x1
jax: 0.10.0
libtpu: 0.0.40
codegen_flags: <defaults>
</compile_context>

<pallas_src>
import functools

import jax
import jax.numpy as jnp
import numpy as np
from jax.experimental import pallas as pl
from jax.experimental.pallas import tpu as pltpu


def _sparsemax_loss_kernel(x_ref, tgt_ref, loss_ref, *, num_classes, n_bisect):
    z = x_ref[...].astype(jnp.float32)              # (C, TN) classes x examples
    tn = z.shape[1]

    # --- bracket the threshold: tau* in [max(z) - 1, max(z)) -----------------
    zmax = jnp.max(z, axis=0, keepdims=True)        # (1, TN)
    lo = zmax - 1.0                                 # f(lo) >= 0
    hi = zmax                                       # f(hi) <  0

    def bisect(_, carry):
        lo, hi = carry
        mid = 0.5 * (lo + hi)
        f = jnp.sum(jnp.maximum(z - mid, 0.0), axis=0, keepdims=True)
        too_low = f > 1.0                            # tau guess too small
        return jnp.where(too_low, mid, lo), jnp.where(too_low, hi, mid)

    lo, hi = jax.lax.fori_loop(0, n_bisect, bisect, (lo, hi), unroll=True)

    # --- exact tau from the (lower-bound) support superset -------------------
    # Fused with the one-hot z_k = z[i, target[i]] gather so this traversal of
    # z serves both reductions (loaded vregs are shared).
    row = jax.lax.broadcasted_iota(jnp.int32, (num_classes, tn), 0)
    onehot = row == tgt_ref[...]                     # (C, TN)
    z_k = jnp.sum(jnp.where(onehot, z, 0.0), axis=0, keepdims=True)

    sup = z > lo                                     # superset of true support
    k = jnp.sum(sup.astype(jnp.float32), axis=0, keepdims=True)   # >= 1
    ssum = jnp.sum(jnp.where(sup, z, 0.0), axis=0, keepdims=True)
    tau = (ssum - 1.0) / k                           # (1, TN), <= tau*

    # --- Michelot polish: shrink the support superset to the exact one -------
    for _ in range(3):
        sup = z > tau
        k = jnp.sum(sup.astype(jnp.float32), axis=0, keepdims=True)
        ssum = jnp.sum(jnp.where(sup, z, 0.0), axis=0, keepdims=True)
        tau = jnp.where(k > 0.5, (ssum - 1.0) / jnp.maximum(k, 1.0), tau)

    # --- loss: final support evaluation fused with x_sum ---------------------
    sup = z > tau
    x_sum = jnp.sum(jnp.where(sup, z * z - tau * tau, 0.0), axis=0,
                    keepdims=True)                   # (1, TN)
    loss = jnp.maximum(0.5 * x_sum - z_k + 0.5, 0.0)
    loss_ref[...] = loss.astype(loss_ref.dtype)      # lane-dense (1, TN) store


def sparsemax_loss_per_example(x, target, *, block_examples=None, n_bisect=14):
    """Per-example sparsemax loss. x: (N, C) float, target: (N,) int."""
    n, c = x.shape
    if block_examples is None:
        # Lane-dense example tile: multiple of 128, grown until each block
        # holds ~1 MiB of f32 logits, capped at 4096 lanes.
        tn = 128
        while tn < 4096 and tn < n and c * (tn * 2) * 4 <= (1 << 20):
            tn *= 2
        # Keep at least 2 grid steps so the single "parallel" axis can be
        # split across both TensorCores on v7x.
        while tn > 128 and pl.cdiv(n, tn) < 2:
            tn //= 2
    else:
        tn = int(block_examples)
    assert tn % 128 == 0, "example tile must be lane-dense (multiple of 128)"
    n_pad = tn * pl.cdiv(n, tn)

    # Classes on sublanes / examples on lanes; keep native dtype (kernel
    # upcasts internally).  Padded example columns produce finite garbage
    # losses that are sliced off below; the transpose and pad fuse into a
    # single XLA copy.
    xt = x.T                                         # (C, N)
    tgt = target.reshape(1, n).astype(jnp.int32)     # (1, N)
    if n_pad != n:
        xt = jnp.pad(xt, ((0, 0), (0, n_pad - n)))
        tgt = jnp.pad(tgt, ((0, 0), (0, n_pad - n)))

    # ~3 VALU ops per element per bisection step + ~24 for the fused epilogue;
    # no transcendentals anywhere in the kernel.
    cost = pl.CostEstimate(
        flops=int(n_pad * c * (3 * n_bisect + 24)),
        transcendentals=0,
        bytes_accessed=int(n_pad * c * x.dtype.itemsize + 2 * n_pad * 4),
    )

    # Double-buffered native-dtype input block + ~3 f32-sized in-kernel temps.
    block_bytes = c * tn * x.dtype.itemsize
    vmem_bytes = 2 * block_bytes + 3 * c * tn * 4 + 8 * tn * 8
    vmem_limit = int(min(96 * 2**20, max(32 * 2**20, 2 * vmem_bytes)))

    out = pl.pallas_call(
        functools.partial(_sparsemax_loss_kernel, num_classes=c,
                          n_bisect=n_bisect),
        out_shape=jax.ShapeDtypeStruct((1, n_pad), jnp.float32),
        grid_spec=pltpu.PrefetchScalarGridSpec(
            num_scalar_prefetch=0,
            grid=(n_pad // tn,),
            in_specs=[
                pl.BlockSpec((c, tn), lambda i: (0, i)),   # logits (C, TN)
                pl.BlockSpec((1, tn), lambda i: (0, i)),   # targets (1, TN)
            ],
            out_specs=pl.BlockSpec((1, tn), lambda i: (0, i)),
        ),
        compiler_params=pltpu.CompilerParams(
            dimension_semantics=("parallel",),
            vmem_limit_bytes=vmem_limit,
        ),
        cost_estimate=cost,
    )(xt, tgt)
    return out[0, :n]


class SparsemaxLoss:
    """JAX/Pallas port of researchlib SparsemaxLoss (forward only)."""

    def __init__(self, weight=None, ignore_index=-100,
                 reduction="elementwise_mean"):
        assert reduction in ["elementwise_mean", "sum", "none"]
        self.reduction = reduction
        self.weight = weight            # unused in forward (as in reference)
        self.ignore_index = ignore_index

    def __call__(self, input, target):
        loss = sparsemax_loss_per_example(input, target)
        # Matches the PyTorch module: the mask is only applied for
        # ignore_index >= 0 (the default -100 is never masked).
        if self.ignore_index >= 0:
            ignored = target == self.ignore_index
            size = (target.shape[0] - jnp.sum(ignored)).astype(jnp.float32)
            loss = jnp.where(ignored, 0.0, loss)
        else:
            size = jnp.float32(target.shape[0])
        if self.reduction == "sum":
            loss = jnp.sum(loss)
        elif self.reduction == "elementwise_mean":
            loss = jnp.sum(loss) / size
        return loss


def _reference_loss(x, target, reduction="elementwise_mean"):
    """Pure-JAX reference mirroring the PyTorch code (uses sort)."""
    n, c = x.shape
    srt = -jnp.sort(-x, axis=1)                       # descending sort
    cs = jnp.cumsum(srt, axis=1) - 1.0
    rhos = jnp.arange(1, c + 1, dtype=x.dtype)[None, :]
    support = rhos * srt > cs
    k = jnp.sum(support, axis=1, keepdims=True)
    tau = jnp.take_along_axis(cs, k - 1, axis=1) / k.astype(x.dtype)
    z_k = jnp.take_along_axis(x, target[:, None], axis=1)[:, 0]
    sup = x > tau
    xx = jnp.sum(jnp.where(sup, x * x - tau * tau, 0.0), axis=1)
    loss = jnp.clip(xx / 2.0 - z_k + 0.5, 0.0)
    if reduction == "elementwise_mean":
        return jnp.mean(loss)
    if reduction == "sum":
        return jnp.sum(loss)
    return loss


if __name__ == "__main__":
    key = jax.random.PRNGKey(0)
    kx, kt, kx2, kt2 = jax.random.split(key, 4)

    # Small shape from the module spec: input (n, num_classes), target (n,).
    N, C = 8, 32
    x = jax.random.normal(kx, (N, C), dtype=jnp.float32) * 2.0
    target = jax.random.randint(kt, (N,), 0, C, dtype=jnp.int32)

    # per-example losses
    per_ex = jax.block_until_ready(SparsemaxLoss(reduction="none")(x, target))
    ref_per_ex = jax.block_until_ready(_reference_loss(x, target, "none"))
    np.testing.assert_allclose(np.asarray(per_ex), np.asarray(ref_per_ex),
                               rtol=1e-5, atol=1e-5)

    # mean-reduced loss (default reduction)
    loss_fn = SparsemaxLoss()                  # defaults: mean, ignore_index=-100
    loss = jax.block_until_ready(loss_fn(x, target))
    ref = jax.block_until_ready(_reference_loss(x, target))
    np.testing.assert_allclose(np.asarray(loss), np.asarray(ref),
                               rtol=1e-5, atol=1e-5)

    # A ragged, multi-block case to exercise the grid + padded example lanes.
    N2 = 300
    x2 = jax.random.normal(kx2, (N2, C), dtype=jnp.float32) * 2.0
    target2 = jax.random.randint(kt2, (N2,), 0, C, dtype=jnp.int32)
    per_ex2 = jax.block_until_ready(
        SparsemaxLoss(reduction="none")(x2, target2))
    ref_per_ex2 = jax.block_until_ready(_reference_loss(x2, target2, "none"))
    np.testing.assert_allclose(np.asarray(per_ex2), np.asarray(ref_per_ex2),
                               rtol=1e-5, atol=1e-5)

    print("KERNEL_OK")
</pallas_src>

<mosaic_0001>
module attributes {stable_mosaic.version = 11 : i64} {
  func.func @_sparsemax_loss_kernel(%arg0: i32, %arg1: memref<32x128xf32, #tpu.memory_space<vmem>>, %arg2: memref<1x128xi32, #tpu.memory_space<vmem>>, %arg3: memref<1x128xf32, #tpu.memory_space<vmem>>) attributes {dimension_semantics = [#tpu.dimension_semantics<parallel>], iteration_bounds = array<i64: 1>, scalar_prefetch = 0 : i64, scratch_operands = 0 : i64, tpu.core_type = #tpu.core_type<tc>, window_params = [{transform_indices = @transform_0, window_bounds = array<i64: 32, 128>}, {transform_indices = @transform_1, window_bounds = array<i64: 1, 128>}, {transform_indices = @transform_2, window_bounds = array<i64: 1, 128>}]} {
    %c0 = arith.constant 0 : index
    %c0_0 = arith.constant 0 : index
    %0 = vector.load %arg1[%c0, %c0_0] : memref<32x128xf32, #tpu.memory_space<vmem>>, vector<32x128xf32>
    %cst = arith.constant dense<0xFF800000> : vector<128xf32>
    %1 = vector.multi_reduction <maximumf>, %0, %cst [0] : vector<32x128xf32> to vector<128xf32>
    %2 = vector.shape_cast %1 : vector<128xf32> to vector<1x128xf32>
    %cst_1 = arith.constant 1.000000e+00 : f32
    %3 = vector.broadcast %cst_1 : f32 to vector<1x128xf32>
    %4 = arith.subf %2, %3 : vector<1x128xf32>
    %c0_i32 = arith.constant 0 : i32
    %5 = arith.addf %4, %2 : vector<1x128xf32>
    %cst_2 = arith.constant 5.000000e-01 : f32
    %6 = vector.broadcast %cst_2 : f32 to vector<1x128xf32>
    %7 = arith.mulf %6, %5 : vector<1x128xf32>
    %8 = vector.broadcast %7 : vector<1x128xf32> to vector<32x128xf32>
    %9 = arith.subf %0, %8 : vector<32x128xf32>
    %cst_3 = arith.constant 0.000000e+00 : f32
    %10 = vector.broadcast %cst_3 : f32 to vector<32x128xf32>
    %11 = arith.maximumf %9, %10 : vector<32x128xf32>
    %cst_4 = arith.constant dense<0.000000e+00> : vector<128xf32>
    %12 = vector.multi_reduction <add>, %11, %cst_4 [0] : vector<32x128xf32> to vector<128xf32>
    %13 = vector.shape_cast %12 : vector<128xf32> to vector<1x128xf32>
    %cst_5 = arith.constant 1.000000e+00 : f32
    %14 = vector.broadcast %cst_5 : f32 to vector<1x128xf32>
    %15 = arith.cmpf ogt, %13, %14 : vector<1x128xf32>
    %16 = arith.select %15, %7, %4 : vector<1x128xi1>, vector<1x128xf32>
    %17 = arith.select %15, %2, %7 : vector<1x128xi1>, vector<1x128xf32>
    %c1_i32 = arith.constant 1 : i32
    %18 = arith.addf %16, %17 : vector<1x128xf32>
    %cst_6 = arith.constant 5.000000e-01 : f32
    %19 = vector.broadcast %cst_6 : f32 to vector<1x128xf32>
    %20 = arith.mulf %19, %18 : vector<1x128xf32>
    %21 = vector.broadcast %20 : vector<1x128xf32> to vector<32x128xf32>
    %22 = arith.subf %0, %21 : vector<32x128xf32>
    %cst_7 = arith.constant 0.000000e+00 : f32
    %23 = vector.broadcast %cst_7 : f32 to vector<32x128xf32>
    %24 = arith.maximumf %22, %23 : vector<32x128xf32>
    %cst_8 = arith.constant dense<0.000000e+00> : vector<128xf32>
    %25 = vector.multi_reduction <add>, %24, %cst_8 [0] : vector<32x128xf32> to vector<128xf32>
    %26 = vector.shape_cast %25 : vector<128xf32> to vector<1x128xf32>
    %cst_9 = arith.constant 1.000000e+00 : f32
    %27 = vector.broadcast %cst_9 : f32 to vector<1x128xf32>
    %28 = arith.cmpf ogt, %26, %27 : vector<1x128xf32>
    %29 = arith.select %28, %20, %16 : vector<1x128xi1>, vector<1x128xf32>
    %30 = arith.select %28, %17, %20 : vector<1x128xi1>, vector<1x128xf32>
    %c2_i32 = arith.constant 2 : i32
    %31 = arith.addf %29, %30 : vector<1x128xf32>
    %cst_10 = arith.constant 5.000000e-01 : f32
    %32 = vector.broadcast %cst_10 : f32 to vector<1x128xf32>
    %33 = arith.mulf %32, %31 : vector<1x128xf32>
    %34 = vector.broadcast %33 : vector<1x128xf32> to vector<32x128xf32>
    %35 = arith.subf %0, %34 : vector<32x128xf32>
    %cst_11 = arith.constant 0.000000e+00 : f32
    %36 = vector.broadcast %cst_11 : f32 to vector<32x128xf32>
    %37 = arith.maximumf %35, %36 : vector<32x128xf32>
    %cst_12 = arith.constant dense<0.000000e+00> : vector<128xf32>
    %38 = vector.multi_reduction <add>, %37, %cst_12 [0] : vector<32x128xf32> to vector<128xf32>
    %39 = vector.shape_cast %38 : vector<128xf32> to vector<1x128xf32>
    %cst_13 = arith.constant 1.000000e+00 : f32
    %40 = vector.broadcast %cst_13 : f32 to vector<1x128xf32>
    %41 = arith.cmpf ogt, %39, %40 : vector<1x128xf32>
    %42 = arith.select %41, %33, %29 : vector<1x128xi1>, vector<1x128xf32>
    %43 = arith.select %41, %30, %33 : vector<1x128xi1>, vector<1x128xf32>
    %c3_i32 = arith.constant 3 : i32
    %44 = arith.addf %42, %43 : vector<1x128xf32>
    %cst_14 = arith.constant 5.000000e-01 : f32
    %45 = vector.broadcast %cst_14 : f32 to vector<1x128xf32>
    %46 = arith.mulf %45, %44 : vector<1x128xf32>
    %47 = vector.broadcast %46 : vector<1x128xf32> to vector<32x128xf32>
    %48 = arith.subf %0, %47 : vector<32x128xf32>
    %cst_15 = arith.constant 0.000000e+00 : f32
    %49 = vector.broadcast %cst_15 : f32 to vector<32x128xf32>
    %50 = arith.maximumf %48, %49 : vector<32x128xf32>
    %cst_16 = arith.constant dense<0.000000e+00> : vector<128xf32>
    %51 = vector.multi_reduction <add>, %50, %cst_16 [0] : vector<32x128xf32> to vector<128xf32>
    %52 = vector.shape_cast %51 : vector<128xf32> to vector<1x128xf32>
    %cst_17 = arith.constant 1.000000e+00 : f32
    %53 = vector.broadcast %cst_17 : f32 to vector<1x128xf32>
    %54 = arith.cmpf ogt, %52, %53 : vector<1x128xf32>
    %55 = arith.select %54, %46, %42 : vector<1x128xi1>, vector<1x128xf32>
    %56 = arith.select %54, %43, %46 : vector<1x128xi1>, vector<1x128xf32>
    %c4_i32 = arith.constant 4 : i32
    %57 = arith.addf %55, %56 : vector<1x128xf32>
    %cst_18 = arith.constant 5.000000e-01 : f32
    %58 = vector.broadcast %cst_18 : f32 to vector<1x128xf32>
    %59 = arith.mulf %58, %57 : vector<1x128xf32>
    %60 = vector.broadcast %59 : vector<1x128xf32> to vector<32x128xf32>
    %61 = arith.subf %0, %60 : vector<32x128xf32>
    %cst_19 = arith.constant 0.000000e+00 : f32
    %62 = vector.broadcast %cst_19 : f32 to vector<32x128xf32>
    %63 = arith.maximumf %61, %62 : vector<32x128xf32>
    %cst_20 = arith.constant dense<0.000000e+00> : vector<128xf32>
    %64 = vector.multi_reduction <add>, %63, %cst_20 [0] : vector<32x128xf32> to vector<128xf32>
    %65 = vector.shape_cast %64 : vector<128xf32> to vector<1x128xf32>
    %cst_21 = arith.constant 1.000000e+00 : f32
    %66 = vector.broadcast %cst_21 : f32 to vector<1x128xf32>
    %67 = arith.cmpf ogt, %65, %66 : vector<1x128xf32>
    %68 = arith.select %67, %59, %55 : vector<1x128xi1>, vector<1x128xf32>
    %69 = arith.select %67, %56, %59 : vector<1x128xi1>, vector<1x128xf32>
    %c5_i32 = arith.constant 5 : i32
    %70 = arith.addf %68, %69 : vector<1x128xf32>
    %cst_22 = arith.constant 5.000000e-01 : f32
    %71 = vector.broadcast %cst_22 : f32 to vector<1x128xf32>
    %72 = arith.mulf %71, %70 : vector<1x128xf32>
    %73 = vector.broadcast %72 : vector<1x128xf32> to vector<32x128xf32>
    %74 = arith.subf %0, %73 : vector<32x128xf32>
    %cst_23 = arith.constant 0.000000e+00 : f32
    %75 = vector.broadcast %cst_23 : f32 to vector<32x128xf32>
    %76 = arith.maximumf %74, %75 : vector<32x128xf32>
    %cst_24 = arith.constant dense<0.000000e+00> : vector<128xf32>
    %77 = vector.multi_reduction <add>, %76, %cst_24 [0] : vector<32x128xf32> to vector<128xf32>
    %78 = vector.shape_cast %77 : vector<128xf32> to vector<1x128xf32>
    %cst_25 = arith.constant 1.000000e+00 : f32
    %79 = vector.broadcast %cst_25 : f32 to vector<1x128xf32>
    %80 = arith.cmpf ogt, %78, %79 : vector<1x128xf32>
    %81 = arith.select %80, %72, %68 : vector<1x128xi1>, vector<1x128xf32>
    %82 = arith.select %80, %69, %72 : vector<1x128xi1>, vector<1x128xf32>
    %c6_i32 = arith.constant 6 : i32
    %83 = arith.addf %81, %82 : vector<1x128xf32>
    %cst_26 = arith.constant 5.000000e-01 : f32
    %84 = vector.broadcast %cst_26 : f32 to vector<1x128xf32>
    %85 = arith.mulf %84, %83 : vector<1x128xf32>
    %86 = vector.broadcast %85 : vector<1x128xf32> to vector<32x128xf32>
    %87 = arith.subf %0, %86 : vector<32x128xf32>
    %cst_27 = arith.constant 0.000000e+00 : f32
    %88 = vector.broadcast %cst_27 : f32 to vector<32x128xf32>
    %89 = arith.maximumf %87, %88 : vector<32x128xf32>
    %cst_28 = arith.constant dense<0.000000e+00> : vector<128xf32>
    %90 = vector.multi_reduction <add>, %89, %cst_28 [0] : vector<32x128xf32> to vector<128xf32>
    %91 = vector.shape_cast %90 : vector<128xf32> to vector<1x128xf32>
    %cst_29 = arith.constant 1.000000e+00 : f32
    %92 = vector.broadcast %cst_29 : f32 to vector<1x128xf32>
    %93 = arith.cmpf ogt, %91, %92 : vector<1x128xf32>
    %94 = arith.select %93, %85, %81 : vector<1x128xi1>, vector<1x128xf32>
    %95 = arith.select %93, %82, %85 : vector<1x128xi1>, vector<1x128xf32>
    %c7_i32 = arith.constant 7 : i32
    %96 = arith.addf %94, %95 : vector<1x128xf32>
    %cst_30 = arith.constant 5.000000e-01 : f32
    %97 = vector.broadcast %cst_30 : f32 to vector<1x128xf32>
    %98 = arith.mulf %97, %96 : vector<1x128xf32>
    %99 = vector.broadcast %98 : vector<1x128xf32> to vector<32x128xf32>
    %100 = arith.subf %0, %99 : vector<32x128xf32>
    %cst_31 = arith.constant 0.000000e+00 : f32
    %101 = vector.broadcast %cst_31 : f32 to vector<32x128xf32>
    %102 = arith.maximumf %100, %101 : vector<32x128xf32>
    %cst_32 = arith.constant dense<0.000000e+00> : vector<128xf32>
    %103 = vector.multi_reduction <add>, %102, %cst_32 [0] : vector<32x128xf32> to vector<128xf32>
    %104 = vector.shape_cast %103 : vector<128xf32> to vector<1x128xf32>
    %cst_33 = arith.constant 1.000000e+00 : f32
    %105 = vector.broadcast %cst_33 : f32 to vector<1x128xf32>
    %106 = arith.cmpf ogt, %104, %105 : vector<1x128xf32>
    %107 = arith.select %106, %98, %94 : vector<1x128xi1>, vector<1x128xf32>
    %108 = arith.select %106, %95, %98 : vector<1x128xi1>, vector<1x128xf32>
    %c8_i32 = arith.constant 8 : i32
    %109 = arith.addf %107, %108 : vector<1x128xf32>
    %cst_34 = arith.constant 5.000000e-01 : f32
    %110 = vector.broadcast %cst_34 : f32 to vector<1x128xf32>
    %111 = arith.mulf %110, %109 : vector<1x128xf32>
    %112 = vector.broadcast %111 : vector<1x128xf32> to vector<32x128xf32>
    %113 = arith.subf %0, %112 : vector<32x128xf32>
    %cst_35 = arith.constant 0.000000e+00 : f32
    %114 = vector.broadcast %cst_35 : f32 to vector<32x128xf32>
    %115 = arith.maximumf %113, %114 : vector<32x128xf32>
    %cst_36 = arith.constant dense<0.000000e+00> : vector<128xf32>
    %116 = vector.multi_reduction <add>, %115, %cst_36 [0] : vector<32x128xf32> to vector<128xf32>
    %117 = vector.shape_cast %116 : vector<128xf32> to vector<1x128xf32>
    %cst_37 = arith.constant 1.000000e+00 : f32
    %118 = vector.broadcast %cst_37 : f32 to vector<1x128xf32>
    %119 = arith.cmpf ogt, %117, %118 : vector<1x128xf32>
    %120 = arith.select %119, %111, %107 : vector<1x128xi1>, vector<1x128xf32>
    %121 = arith.select %119, %108, %111 : vector<1x128xi1>, vector<1x128xf32>
    %c9_i32 = arith.constant 9 : i32
    %122 = arith.addf %120, %121 : vector<1x128xf32>
    %cst_38 = arith.constant 5.000000e-01 : f32
    %123 = vector.broadcast %cst_38 : f32 to vector<1x128xf32>
    %124 = arith.mulf %123, %122 : vector<1x128xf32>
    %125 = vector.broadcast %124 : vector<1x128xf32> to vector<32x128xf32>
    %126 = arith.subf %0, %125 : vector<32x128xf32>
    %cst_39 = arith.constant 0.000000e+00 : f32
    %127 = vector.broadcast %cst_39 : f32 to vector<32x128xf32>
    %128 = arith.maximumf %126, %127 : vector<32x128xf32>
    %cst_40 = arith.constant dense<0.000000e+00> : vector<128xf32>
    %129 = vector.multi_reduction <add>, %128, %cst_40 [0] : vector<32x128xf32> to vector<128xf32>
    %130 = vector.shape_cast %129 : vector<128xf32> to vector<1x128xf32>
    %cst_41 = arith.constant 1.000000e+00 : f32
    %131 = vector.broadcast %cst_41 : f32 to vector<1x128xf32>
    %132 = arith.cmpf ogt, %130, %131 : vector<1x128xf32>
    %133 = arith.select %132, %124, %120 : vector<1x128xi1>, vector<1x128xf32>
    %134 = arith.select %132, %121, %124 : vector<1x128xi1>, vector<1x128xf32>
    %c10_i32 = arith.constant 10 : i32
    %135 = arith.addf %133, %134 : vector<1x128xf32>
    %cst_42 = arith.constant 5.000000e-01 : f32
    %136 = vector.broadcast %cst_42 : f32 to vector<1x128xf32>
    %137 = arith.mulf %136, %135 : vector<1x128xf32>
    %138 = vector.broadcast %137 : vector<1x128xf32> to vector<32x128xf32>
    %139 = arith.subf %0, %138 : vector<32x128xf32>
    %cst_43 = arith.constant 0.000000e+00 : f32
    %140 = vector.broadcast %cst_43 : f32 to vector<32x128xf32>
    %141 = arith.maximumf %139, %140 : vector<32x128xf32>
    %cst_44 = arith.constant dense<0.000000e+00> : vector<128xf32>
    %142 = vector.multi_reduction <add>, %141, %cst_44 [0] : vector<32x128xf32> to vector<128xf32>
    %143 = vector.shape_cast %142 : vector<128xf32> to vector<1x128xf32>
    %cst_45 = arith.constant 1.000000e+00 : f32
    %144 = vector.broadcast %cst_45 : f32 to vector<1x128xf32>
    %145 = arith.cmpf ogt, %143, %144 : vector<1x128xf32>
    %146 = arith.select %145, %137, %133 : vector<1x128xi1>, vector<1x128xf32>
    %147 = arith.select %145, %134, %137 : vector<1x128xi1>, vector<1x128xf32>
    %c11_i32 = arith.constant 11 : i32
    %148 = arith.addf %146, %147 : vector<1x128xf32>
    %cst_46 = arith.constant 5.000000e-01 : f32
    %149 = vector.broadcast %cst_46 : f32 to vector<1x128xf32>
    %150 = arith.mulf %149, %148 : vector<1x128xf32>
    %151 = vector.broadcast %150 : vector<1x128xf32> to vector<32x128xf32>
    %152 = arith.subf %0, %151 : vector<32x128xf32>
    %cst_47 = arith.constant 0.000000e+00 : f32
    %153 = vector.broadcast %cst_47 : f32 to vector<32x128xf32>
    %154 = arith.maximumf %152, %153 : vector<32x128xf32>
    %cst_48 = arith.constant dense<0.000000e+00> : vector<128xf32>
    %155 = vector.multi_reduction <add>, %154, %cst_48 [0] : vector<32x128xf32> to vector<128xf32>
    %156 = vector.shape_cast %155 : vector<128xf32> to vector<1x128xf32>
    %cst_49 = arith.constant 1.000000e+00 : f32
    %157 = vector.broadcast %cst_49 : f32 to vector<1x128xf32>
    %158 = arith.cmpf ogt, %156, %157 : vector<1x128xf32>
    %159 = arith.select %158, %150, %146 : vector<1x128xi1>, vector<1x128xf32>
    %160 = arith.select %158, %147, %150 : vector<1x128xi1>, vector<1x128xf32>
    %c12_i32 = arith.constant 12 : i32
    %161 = arith.addf %159, %160 : vector<1x128xf32>
    %cst_50 = arith.constant 5.000000e-01 : f32
    %162 = vector.broadcast %cst_50 : f32 to vector<1x128xf32>
    %163 = arith.mulf %162, %161 : vector<1x128xf32>
    %164 = vector.broadcast %163 : vector<1x128xf32> to vector<32x128xf32>
    %165 = arith.subf %0, %164 : vector<32x128xf32>
    %cst_51 = arith.constant 0.000000e+00 : f32
    %166 = vector.broadcast %cst_51 : f32 to vector<32x128xf32>
    %167 = arith.maximumf %165, %166 : vector<32x128xf32>
    %cst_52 = arith.constant dense<0.000000e+00> : vector<128xf32>
    %168 = vector.multi_reduction <add>, %167, %cst_52 [0] : vector<32x128xf32> to vector<128xf32>
    %169 = vector.shape_cast %168 : vector<128xf32> to vector<1x128xf32>
    %cst_53 = arith.constant 1.000000e+00 : f32
    %170 = vector.broadcast %cst_53 : f32 to vector<1x128xf32>
    %171 = arith.cmpf ogt, %169, %170 : vector<1x128xf32>
    %172 = arith.select %171, %163, %159 : vector<1x128xi1>, vector<1x128xf32>
    %173 = arith.select %171, %160, %163 : vector<1x128xi1>, vector<1x128xf32>
    %c13_i32 = arith.constant 13 : i32
    %174 = arith.addf %172, %173 : vector<1x128xf32>
    %cst_54 = arith.constant 5.000000e-01 : f32
    %175 = vector.broadcast %cst_54 : f32 to vector<1x128xf32>
    %176 = arith.mulf %175, %174 : vector<1x128xf32>
    %177 = vector.broadcast %176 : vector<1x128xf32> to vector<32x128xf32>
    %178 = arith.subf %0, %177 : vector<32x128xf32>
    %cst_55 = arith.constant 0.000000e+00 : f32
    %179 = vector.broadcast %cst_55 : f32 to vector<32x128xf32>
    %180 = arith.maximumf %178, %179 : vector<32x128xf32>
    %cst_56 = arith.constant dense<0.000000e+00> : vector<128xf32>
    %181 = vector.multi_reduction <add>, %180, %cst_56 [0] : vector<32x128xf32> to vector<128xf32>
    %182 = vector.shape_cast %181 : vector<128xf32> to vector<1x128xf32>
    %cst_57 = arith.constant 1.000000e+00 : f32
    %183 = vector.broadcast %cst_57 : f32 to vector<1x128xf32>
    %184 = arith.cmpf ogt, %182, %183 : vector<1x128xf32>
    %185 = arith.select %184, %176, %172 : vector<1x128xi1>, vector<1x128xf32>
    %186 = arith.select %184, %173, %176 : vector<1x128xi1>, vector<1x128xf32>
    %187 = tpu.iota {dimensions = array<i32: 0>} : vector<32x128xi32>
    %c0_58 = arith.constant 0 : index
    %c0_59 = arith.constant 0 : index
    %188 = vector.load %arg2[%c0_58, %c0_59] : memref<1x128xi32, #tpu.memory_space<vmem>>, vector<1x128xi32>
    %189 = vector.broadcast %188 : vector<1x128xi32> to vector<32x128xi32>
    %190 = arith.cmpi eq, %187, %189 : vector<32x128xi32>
    %cst_60 = arith.constant 0.000000e+00 : f32
    %191 = vector.broadcast %cst_60 : f32 to vector<32x128xf32>
    %192 = arith.select %190, %0, %191 : vector<32x128xi1>, vector<32x128xf32>
    %cst_61 = arith.constant dense<0.000000e+00> : vector<128xf32>
    %193 = vector.multi_reduction <add>, %192, %cst_61 [0] : vector<32x128xf32> to vector<128xf32>
    %194 = vector.shape_cast %193 : vector<128xf32> to vector<1x128xf32>
    %195 = vector.broadcast %185 : vector<1x128xf32> to vector<32x128xf32>
    %196 = arith.cmpf ogt, %0, %195 : vector<32x128xf32>
    %197 = arith.extui %196 : vector<32x128xi1> to vector<32x128xi32>
    %198 = arith.sitofp %197 : vector<32x128xi32> to vector<32x128xf32>
    %cst_62 = arith.constant dense<0.000000e+00> : vector<128xf32>
    %199 = vector.multi_reduction <add>, %198, %cst_62 [0] : vector<32x128xf32> to vector<128xf32>
    %200 = vector.shape_cast %199 : vector<128xf32> to vector<1x128xf32>
    %cst_63 = arith.constant 0.000000e+00 : f32
    %201 = vector.broadcast %cst_63 : f32 to vector<32x128xf32>
    %202 = arith.select %196, %0, %201 : vector<32x128xi1>, vector<32x128xf32>
    %cst_64 = arith.constant dense<0.000000e+00> : vector<128xf32>
    %203 = vector.multi_reduction <add>, %202, %cst_64 [0] : vector<32x128xf32> to vector<128xf32>
    %204 = vector.shape_cast %203 : vector<128xf32> to vector<1x128xf32>
    %cst_65 = arith.constant 1.000000e+00 : f32
    %205 = vector.broadcast %cst_65 : f32 to vector<1x128xf32>
    %206 = arith.subf %204, %205 : vector<1x128xf32>
    %207 = arith.divf %206, %200 : vector<1x128xf32>
    %208 = vector.broadcast %207 : vector<1x128xf32> to vector<32x128xf32>
    %209 = arith.cmpf ogt, %0, %208 : vector<32x128xf32>
    %210 = arith.extui %209 : vector<32x128xi1> to vector<32x128xi32>
    %211 = arith.sitofp %210 : vector<32x128xi32> to vector<32x128xf32>
    %cst_66 = arith.constant dense<0.000000e+00> : vector<128xf32>
    %212 = vector.multi_reduction <add>, %211, %cst_66 [0] : vector<32x128xf32> to vector<128xf32>
    %213 = vector.shape_cast %212 : vector<128xf32> to vector<1x128xf32>
    %cst_67 = arith.constant 0.000000e+00 : f32
    %214 = vector.broadcast %cst_67 : f32 to vector<32x128xf32>
    %215 = arith.select %209, %0, %214 : vector<32x128xi1>, vector<32x128xf32>
    %cst_68 = arith.constant dense<0.000000e+00> : vector<128xf32>
    %216 = vector.multi_reduction <add>, %215, %cst_68 [0] : vector<32x128xf32> to vector<128xf32>
    %217 = vector.shape_cast %216 : vector<128xf32> to vector<1x128xf32>
    %cst_69 = arith.constant 5.000000e-01 : f32
    %218 = vector.broadcast %cst_69 : f32 to vector<1x128xf32>
    %219 = arith.cmpf ogt, %213, %218 : vector<1x128xf32>
    %cst_70 = arith.constant 1.000000e+00 : f32
    %220 = vector.broadcast %cst_70 : f32 to vector<1x128xf32>
    %221 = arith.subf %217, %220 : vector<1x128xf32>
    %cst_71 = arith.constant 1.000000e+00 : f32
    %222 = vector.broadcast %cst_71 : f32 to vector<1x128xf32>
    %223 = arith.maximumf %213, %222 : vector<1x128xf32>
    %224 = arith.divf %221, %223 : vector<1x128xf32>
    %225 = arith.select %219, %224, %207 : vector<1x128xi1>, vector<1x128xf32>
    %226 = vector.broadcast %225 : vector<1x128xf32> to vector<32x128xf32>
    %227 = arith.cmpf ogt, %0, %226 : vector<32x128xf32>
    %228 = arith.extui %227 : vector<32x128xi1> to vector<32x128xi32>
    %229 = arith.sitofp %228 : vector<32x128xi32> to vector<32x128xf32>
    %cst_72 = arith.constant dense<0.000000e+00> : vector<128xf32>
    %230 = vector.multi_reduction <add>, %229, %cst_72 [0] : vector<32x128xf32> to vector<128xf32>
    %231 = vector.shape_cast %230 : vector<128xf32> to vector<1x128xf32>
    %cst_73 = arith.constant 0.000000e+00 : f32
    %232 = vector.broadcast %cst_73 : f32 to vector<32x128xf32>
    %233 = arith.select %227, %0, %232 : vector<32x128xi1>, vector<32x128xf32>
    %cst_74 = arith.constant dense<0.000000e+00> : vector<128xf32>
    %234 = vector.multi_reduction <add>, %233, %cst_74 [0] : vector<32x128xf32> to vector<128xf32>
    %235 = vector.shape_cast %234 : vector<128xf32> to vector<1x128xf32>
    %cst_75 = arith.constant 5.000000e-01 : f32
    %236 = vector.broadcast %cst_75 : f32 to vector<1x128xf32>
    %237 = arith.cmpf ogt, %231, %236 : vector<1x128xf32>
    %cst_76 = arith.constant 1.000000e+00 : f32
    %238 = vector.broadcast %cst_76 : f32 to vector<1x128xf32>
    %239 = arith.subf %235, %238 : vector<1x128xf32>
    %cst_77 = arith.constant 1.000000e+00 : f32
    %240 = vector.broadcast %cst_77 : f32 to vector<1x128xf32>
    %241 = arith.maximumf %231, %240 : vector<1x128xf32>
    %242 = arith.divf %239, %241 : vector<1x128xf32>
    %243 = arith.select %237, %242, %225 : vector<1x128xi1>, vector<1x128xf32>
    %244 = vector.broadcast %243 : vector<1x128xf32> to vector<32x128xf32>
    %245 = arith.cmpf ogt, %0, %244 : vector<32x128xf32>
    %246 = arith.extui %245 : vector<32x128xi1> to vector<32x128xi32>
    %247 = arith.sitofp %246 : vector<32x128xi32> to vector<32x128xf32>
    %cst_78 = arith.constant dense<0.000000e+00> : vector<128xf32>
    %248 = vector.multi_reduction <add>, %247, %cst_78 [0] : vector<32x128xf32> to vector<128xf32>
    %249 = vector.shape_cast %248 : vector<128xf32> to vector<1x128xf32>
    %cst_79 = arith.constant 0.000000e+00 : f32
    %250 = vector.broadcast %cst_79 : f32 to vector<32x128xf32>
    %251 = arith.select %245, %0, %250 : vector<32x128xi1>, vector<32x128xf32>
    %cst_80 = arith.constant dense<0.000000e+00> : vector<128xf32>
    %252 = vector.multi_reduction <add>, %251, %cst_80 [0] : vector<32x128xf32> to vector<128xf32>
    %253 = vector.shape_cast %252 : vector<128xf32> to vector<1x128xf32>
    %cst_81 = arith.constant 5.000000e-01 : f32
    %254 = vector.broadcast %cst_81 : f32 to vector<1x128xf32>
    %255 = arith.cmpf ogt, %249, %254 : vector<1x128xf32>
    %cst_82 = arith.constant 1.000000e+00 : f32
    %256 = vector.broadcast %cst_82 : f32 to vector<1x128xf32>
    %257 = arith.subf %253, %256 : vector<1x128xf32>
    %cst_83 = arith.constant 1.000000e+00 : f32
    %258 = vector.broadcast %cst_83 : f32 to vector<1x128xf32>
    %259 = arith.maximumf %249, %258 : vector<1x128xf32>
    %260 = arith.divf %257, %259 : vector<1x128xf32>
    %261 = arith.select %255, %260, %243 : vector<1x128xi1>, vector<1x128xf32>
    %262 = vector.broadcast %261 : vector<1x128xf32> to vector<32x128xf32>
    %263 = arith.cmpf ogt, %0, %262 : vector<32x128xf32>
    %264 = arith.mulf %0, %0 : vector<32x128xf32>
    %265 = arith.mulf %261, %261 : vector<1x128xf32>
    %266 = vector.broadcast %265 : vector<1x128xf32> to vector<32x128xf32>
    %267 = arith.subf %264, %266 : vector<32x128xf32>
    %cst_84 = arith.constant 0.000000e+00 : f32
    %268 = vector.broadcast %cst_84 : f32 to vector<32x128xf32>
    %269 = arith.select %263, %267, %268 : vector<32x128xi1>, vector<32x128xf32>
    %cst_85 = arith.constant dense<0.000000e+00> : vector<128xf32>
    %270 = vector.multi_reduction <add>, %269, %cst_85 [0] : vector<32x128xf32> to vector<128xf32>
    %271 = vector.shape_cast %270 : vector<128xf32> to vector<1x128xf32>
    %cst_86 = arith.constant 5.000000e-01 : f32
    %272 = vector.broadcast %cst_86 : f32 to vector<1x128xf32>
    %273 = arith.mulf %272, %271 : vector<1x128xf32>
    %274 = arith.subf %273, %194 : vector<1x128xf32>
    %cst_87 = arith.constant 5.000000e-01 : f32
    %275 = vector.broadcast %cst_87 : f32 to vector<1x128xf32>
    %276 = arith.addf %274, %275 : vector<1x128xf32>
    %cst_88 = arith.constant 0.000000e+00 : f32
    %277 = vector.broadcast %cst_88 : f32 to vector<1x128xf32>
    %278 = arith.maximumf %276, %277 : vector<1x128xf32>
    %c0_89 = arith.constant 0 : index
    %c0_90 = arith.constant 0 : index
    %279 = vector.load %arg3[%c0_89, %c0_90] : memref<1x128xf32, #tpu.memory_space<vmem>>, vector<1x128xf32>
    tpu.vector_store %arg3[%c0_89, %c0_90], %278 {strides = array<i32>} : memref<1x128xf32, #tpu.memory_space<vmem>>, vector<1x128xf32>,
    return
  }
  func.func @transform_0(%arg0: i32) -> (i32, i32) {
    %c0_i32 = arith.constant 0 : i32
    %c0_i32_0 = arith.constant 0 : i32
    return %c0_i32, %arg0 : i32, i32
  }
  func.func @transform_1(%arg0: i32) -> (i32, i32) {
    %c0_i32 = arith.constant 0 : i32
    %c0_i32_0 = arith.constant 0 : i32
    return %c0_i32, %arg0 : i32, i32
  }
  func.func @transform_2(%arg0: i32) -> (i32, i32) {
    %c0_i32 = arith.constant 0 : i32
    %c0_i32_0 = arith.constant 0 : i32
    return %c0_i32, %arg0 : i32, i32
  }
}

</mosaic_0001>

<llo_original>
// kernel: tpu_custom_call.1
$region0: #{tpu_custom_call.1}
  #allocation0 [shape = 'u32[]', space=smem, size = 0x4, offset = 0x4, fixed_abs, tag = 'smem constant byte address 0x4 - core index']
  #allocation1 [shape = 'u32[144,128]{1,0:T(1,128)}', space=vmem, size = 0x12000, scoped, tag = 'internal scratch']
  %s0 = inlined_call_operand.hbm [shape: f32[32,128], index: 0, kind: input, shape index: {}]
  %s1 = inlined_call_operand.vmem [shape: s32[1,128], index: 1, kind: input, shape index: {}]
  %s2 = inlined_call_operand.hbm [shape: f32[1,128], index: 2, kind: output, shape index: {}]
  %s3 = sld [smem:[#allocation0]]
  $region22: #{tpu_custom_call.1} parent=0
    _
  %s5 = ssub.s32 1, %s3
  %s6 = scalar_select 0, %s5, %s3
  $region1: #{tpu_custom_call.1} parent=0
    #allocation2 [shape = 'u8[16384]{0}', space=vmem, size = 0x4000, scoped, tag = 'input window, operand 0, single buffered']
    #allocation3 [shape = 's32[1]{0}', space=sflag, size = 0x4, scoped, tag = 'scoped memory for tpu_custom_call.1']
    #allocation4 [shape = 's32[1]{0}', space=sflag, size = 0x4, scoped, tag = 'scoped memory for tpu_custom_call.1']
    #allocation5 [shape = 'u8[512]{0}', space=vmem, size = 0x400, scoped, tag = 'output window, operand 0, single buffered']
    %7 = vsyncpa [#allocation3], 0
    %8 = vsyncpa [#allocation4], 0
    // Predicated region
    $region2: #{tpu_custom_call.1} parent=1 // pred_check
      _
    $region3: #{tpu_custom_call.1} parent=1 // pred_check_branch
      %10 = sbr.rel (0) target = $region5
    $region4: #{tpu_custom_call.1} parent=1 // pred_region
      %s12 = ssub.s32 512, 512
      %13 = vsyncadd [#allocation3], %s12
      %s14 = sshll.u32 [#allocation2], 4
      %s15 = int_to_ptr.vmem [resolvable:$true] %s14
      %20 = dma.hbm_to_vmem [thread:$0]  %s0, 512, %s15, [#allocation3], 128, 128, 8
    $region5: #{tpu_custom_call.1} parent=1 // pred_fallthru
      _
    // Predicated region
    $region6: #{tpu_custom_call.1} parent=1 // pred_check
      _
    $region7: #{tpu_custom_call.1} parent=1 // pred_check_branch
      %22 = sbr.rel (0) target = $region9
    $region8: #{tpu_custom_call.1} parent=1 // pred_region
      _
    $region9: #{tpu_custom_call.1} parent=1 // pred_fallthru
      _
    // Predicated region
    $region10: #{tpu_custom_call.1} parent=1 // pred_check
      _
    $region11: #{tpu_custom_call.1} parent=1 // pred_check_branch
      %24 = sbr.rel (0) target = $region13
    $region12: #{tpu_custom_call.1} parent=1 // pred_region
      %25 = dma.done [#allocation3], 512
    $region13: #{tpu_custom_call.1} parent=1 // pred_fallthru
      _
    %v26 = vld [vmem:[#allocation2] sm:$0xff]
    %v27 = vld [vmem:[#allocation2 + $0x8] sm:$0xff]
    %v28 = vld [vmem:[#allocation2 + $0x10] sm:$0xff]
    %v29 = vld [vmem:[#allocation2 + $0x18] sm:$0xff]
    %v30 = vmax.f32 %v26, %v27
    %v31 = vmax.f32 %v28, %v29
    %v32 = vmax.f32 %v30, %v31
    %v33 = vrot.slane %v32, 4
    %v34 = vmax.f32 %v32, %v33
    %v35 = vrot.slane %v34, 2
    %v36 = vmax.f32 %v34, %v35
    %v37 = vrot.slane %v36, 1
    %v38 = vmax.f32 %v36, %v37
    %v39 = vsub.f32 %v38, 1.0
    %v40 = vadd.f32 %v39, %v38
    %v41 = vmul.f32 %v40, 0.5
    %v42 = vsub.f32 %v26, %v41
    %v43 = vsub.f32 %v27, %v41
    %v44 = vsub.f32 %v28, %v41
    %v45 = vsub.f32 %v29, %v41
    %v46 = vmax.f32 %v42, 0.0
    %v47 = vmax.f32 %v43, 0.0
    %v48 = vmax.f32 %v44, 0.0
    %v49 = vmax.f32 %v45, 0.0
    %v50 = vadd.f32 %v46, %v47
    %v51 = vadd.f32 %v50, %v48
    %v52 = vadd.f32 %v51, %v49
    %v53 = vrot.slane %v52, 4
    %v54 = vadd.f32 %v52, %v53
    %v55 = vrot.slane %v54, 2
    %v56 = vadd.f32 %v54, %v55
    %v57 = vrot.slane %v56, 1
    %v58 = vadd.f32 %v56, %v57
    %vm59 = vcmp.gt.f32.partialorder %v58, 1.0
    %v60 = vsel %vm59, %v41, %v39
    %v61 = vsel %vm59, %v38, %v41
    %v62 = vadd.f32 %v60, %v61
    %v63 = vmul.f32 %v62, 0.5
    %v64 = vsub.f32 %v26, %v63
    %v65 = vsub.f32 %v27, %v63
    %v66 = vsub.f32 %v28, %v63
    %v67 = vsub.f32 %v29, %v63
    %v68 = vmax.f32 %v64, 0.0
    %v69 = vmax.f32 %v65, 0.0
    %v70 = vmax.f32 %v66, 0.0
    %v71 = vmax.f32 %v67, 0.0
    %v72 = vadd.f32 %v68, %v69
    %v73 = vadd.f32 %v72, %v70
    %v74 = vadd.f32 %v73, %v71
    %v75 = vrot.slane %v74, 4
    %v76 = vadd.f32 %v74, %v75
    %v77 = vrot.slane %v76, 2
    %v78 = vadd.f32 %v76, %v77
    %v79 = vrot.slane %v78, 1
    %v80 = vadd.f32 %v78, %v79
    %vm81 = vcmp.gt.f32.partialorder %v80, 1.0
    %v82 = vsel %vm81, %v63, %v60
    %v83 = vsel %vm81, %v61, %v63
    %v84 = vadd.f32 %v82, %v83
    %v85 = vmul.f32 %v84, 0.5
    %v86 = vsub.f32 %v26, %v85
    %v87 = vsub.f32 %v27, %v85
    %v88 = vsub.f32 %v28, %v85
    %v89 = vsub.f32 %v29, %v85
    %v90 = vmax.f32 %v86, 0.0
    %v91 = vmax.f32 %v87, 0.0
    %v92 = vmax.f32 %v88, 0.0
    %v93 = vmax.f32 %v89, 0.0
    %v94 = vadd.f32 %v90, %v91
    %v95 = vadd.f32 %v94, %v92
    %v96 = vadd.f32 %v95, %v93
    %v97 = vrot.slane %v96, 4
    %v98 = vadd.f32 %v96, %v97
    %v99 = vrot.slane %v98, 2
    %v100 = vadd.f32 %v98, %v99
    %v101 = vrot.slane %v100, 1
    %v102 = vadd.f32 %v100, %v101
    %vm103 = vcmp.gt.f32.partialorder %v102, 1.0
    %v104 = vsel %vm103, %v85, %v82
    %v105 = vsel %vm103, %v83, %v85
    %v106 = vadd.f32 %v104, %v105
    %v107 = vmul.f32 %v106, 0.5
    %v108 = vsub.f32 %v26, %v107
    %v109 = vsub.f32 %v27, %v107
    %v110 = vsub.f32 %v28, %v107
    %v111 = vsub.f32 %v29, %v107
    %v112 = vmax.f32 %v108, 0.0
    %v113 = vmax.f32 %v109, 0.0
    %v114 = vmax.f32 %v110, 0.0
    %v115 = vmax.f32 %v111, 0.0
    %v116 = vadd.f32 %v112, %v113
    %v117 = vadd.f32 %v116, %v114
    %v118 = vadd.f32 %v117, %v115
    %v119 = vrot.slane %v118, 4
    %v120 = vadd.f32 %v118, %v119
    %v121 = vrot.slane %v120, 2
    %v122 = vadd.f32 %v120, %v121
    %v123 = vrot.slane %v122, 1
    %v124 = vadd.f32 %v122, %v123
    %vm125 = vcmp.gt.f32.partialorder %v124, 1.0
    %v126 = vsel %vm125, %v107, %v104
    %v127 = vsel %vm125, %v105, %v107
    %v128 = vadd.f32 %v126, %v127
    %v129 = vmul.f32 %v128, 0.5
    %v130 = vsub.f32 %v26, %v129
    %v131 = vsub.f32 %v27, %v129
    %v132 = vsub.f32 %v28, %v129
    %v133 = vsub.f32 %v29, %v129
    %v134 = vmax.f32 %v130, 0.0
    %v135 = vmax.f32 %v131, 0.0
    %v136 = vmax.f32 %v132, 0.0
    %v137 = vmax.f32 %v133, 0.0
    %v138 = vadd.f32 %v134, %v135
    %v139 = vadd.f32 %v138, %v136
    %v140 = vadd.f32 %v139, %v137
    %v141 = vrot.slane %v140, 4
    %v142 = vadd.f32 %v140, %v141
    %v143 = vrot.slane %v142, 2
    %v144 = vadd.f32 %v142, %v143
    %v145 = vrot.slane %v144, 1
    %v146 = vadd.f32 %v144, %v145
    %vm147 = vcmp.gt.f32.partialorder %v146, 1.0
    %v148 = vsel %vm147, %v129, %v126
    %v149 = vsel %vm147, %v127, %v129
    %v150 = vadd.f32 %v148, %v149
    %v151 = vmul.f32 %v150, 0.5
    %v152 = vsub.f32 %v26, %v151
    %v153 = vsub.f32 %v27, %v151
    %v154 = vsub.f32 %v28, %v151
    %v155 = vsub.f32 %v29, %v151
    %v156 = vmax.f32 %v152, 0.0
    %v157 = vmax.f32 %v153, 0.0
    %v158 = vmax.f32 %v154, 0.0
    %v159 = vmax.f32 %v155, 0.0
    %v160 = vadd.f32 %v156, %v157
    %v161 = vadd.f32 %v160, %v158
    %v162 = vadd.f32 %v161, %v159
    %v163 = vrot.slane %v162, 4
    %v164 = vadd.f32 %v162, %v163
    %v165 = vrot.slane %v164, 2
    %v166 = vadd.f32 %v164, %v165
    %v167 = vrot.slane %v166, 1
    %v168 = vadd.f32 %v166, %v167
    %vm169 = vcmp.gt.f32.partialorder %v168, 1.0
    %v170 = vsel %vm169, %v151, %v148
    %v171 = vsel %vm169, %v149, %v151
    %v172 = vadd.f32 %v170, %v171
    %v173 = vmul.f32 %v172, 0.5
    %v174 = vsub.f32 %v26, %v173
    %v175 = vsub.f32 %v27, %v173
    %v176 = vsub.f32 %v28, %v173
    %v177 = vsub.f32 %v29, %v173
    %v178 = vmax.f32 %v174, 0.0
    %v179 = vmax.f32 %v175, 0.0
    %v180 = vmax.f32 %v176, 0.0
    %v181 = vmax.f32 %v177, 0.0
    %v182 = vadd.f32 %v178, %v179
    %v183 = vadd.f32 %v182, %v180
    %v184 = vadd.f32 %v183, %v181
    %v185 = vrot.slane %v184, 4
    %v186 = vadd.f32 %v184, %v185
    %v187 = vrot.slane %v186, 2
    %v188 = vadd.f32 %v186, %v187
    %v189 = vrot.slane %v188, 1
    %v190 = vadd.f32 %v188, %v189
    %vm191 = vcmp.gt.f32.partialorder %v190, 1.0
    %v192 = vsel %vm191, %v173, %v170
    %v193 = vsel %vm191, %v171, %v173
    %v194 = vadd.f32 %v192, %v193
    %v195 = vmul.f32 %v194, 0.5
    %v196 = vsub.f32 %v26, %v195
    %v197 = vsub.f32 %v27, %v195
    %v198 = vsub.f32 %v28, %v195
    %v199 = vsub.f32 %v29, %v195
    %v200 = vmax.f32 %v196, 0.0
    %v201 = vmax.f32 %v197, 0.0
    %v202 = vmax.f32 %v198, 0.0
    %v203 = vmax.f32 %v199, 0.0
    %v204 = vadd.f32 %v200, %v201
    %v205 = vadd.f32 %v204, %v202
    %v206 = vadd.f32 %v205, %v203
    %v207 = vrot.slane %v206, 4
    %v208 = vadd.f32 %v206, %v207
    %v209 = vrot.slane %v208, 2
    %v210 = vadd.f32 %v208, %v209
    %v211 = vrot.slane %v210, 1
    %v212 = vadd.f32 %v210, %v211
    %vm213 = vcmp.gt.f32.partialorder %v212, 1.0
    %v214 = vsel %vm213, %v195, %v192
    %v215 = vsel %vm213, %v193, %v195
    %v216 = vadd.f32 %v214, %v215
    %v217 = vmul.f32 %v216, 0.5
    %v218 = vsub.f32 %v26, %v217
    %v219 = vsub.f32 %v27, %v217
    %v220 = vsub.f32 %v28, %v217
    %v221 = vsub.f32 %v29, %v217
    %v222 = vmax.f32 %v218, 0.0
    %v223 = vmax.f32 %v219, 0.0
    %v224 = vmax.f32 %v220, 0.0
    %v225 = vmax.f32 %v221, 0.0
    %v226 = vadd.f32 %v222, %v223
    %v227 = vadd.f32 %v226, %v224
    %v228 = vadd.f32 %v227, %v225
    %v229 = vrot.slane %v228, 4
    %v230 = vadd.f32 %v228, %v229
    %v231 = vrot.slane %v230, 2
    %v232 = vadd.f32 %v230, %v231
    %v233 = vrot.slane %v232, 1
    %v234 = vadd.f32 %v232, %v233
    %vm235 = vcmp.gt.f32.partialorder %v234, 1.0
    %v236 = vsel %vm235, %v217, %v214
    %v237 = vsel %vm235, %v215, %v217
    %v238 = vadd.f32 %v236, %v237
    %v239 = vmul.f32 %v238, 0.5
    %v240 = vsub.f32 %v26, %v239
    %v241 = vsub.f32 %v27, %v239
    %v242 = vsub.f32 %v28, %v239
    %v243 = vsub.f32 %v29, %v239
    %v244 = vmax.f32 %v240, 0.0
    %v245 = vmax.f32 %v241, 0.0
    %v246 = vmax.f32 %v242, 0.0
    %v247 = vmax.f32 %v243, 0.0
    %v248 = vadd.f32 %v244, %v245
    %v249 = vadd.f32 %v248, %v246
    %v250 = vadd.f32 %v249, %v247
    %v251 = vrot.slane %v250, 4
    %v252 = vadd.f32 %v250, %v251
    %v253 = vrot.slane %v252, 2
    %v254 = vadd.f32 %v252, %v253
    %v255 = vrot.slane %v254, 1
    %v256 = vadd.f32 %v254, %v255
    %vm257 = vcmp.gt.f32.partialorder %v256, 1.0
    %v258 = vsel %vm257, %v239, %v236
    %v259 = vsel %vm257, %v237, %v239
    %v260 = vadd.f32 %v258, %v259
    %v261 = vmul.f32 %v260, 0.5
    %v262 = vsub.f32 %v26, %v261
    %v263 = vsub.f32 %v27, %v261
    %v264 = vsub.f32 %v28, %v261
    %v265 = vsub.f32 %v29, %v261
    %v266 = vmax.f32 %v262, 0.0
    %v267 = vmax.f32 %v263, 0.0
    %v268 = vmax.f32 %v264, 0.0
    %v269 = vmax.f32 %v265, 0.0
    %v270 = vadd.f32 %v266, %v267
    %v271 = vadd.f32 %v270, %v268
    %v272 = vadd.f32 %v271, %v269
    %v273 = vrot.slane %v272, 4
    %v274 = vadd.f32 %v272, %v273
    %v275 = vrot.slane %v274, 2
    %v276 = vadd.f32 %v274, %v275
    %v277 = vrot.slane %v276, 1
    %v278 = vadd.f32 %v276, %v277
    %vm279 = vcmp.gt.f32.partialorder %v278, 1.0
    %v280 = vsel %vm279, %v261, %v258
    %v281 = vsel %vm279, %v259, %v261
    %v282 = vadd.f32 %v280, %v281
    %v283 = vmul.f32 %v282, 0.5
    %v284 = vsub.f32 %v26, %v283
    %v285 = vsub.f32 %v27, %v283
    %v286 = vsub.f32 %v28, %v283
    %v287 = vsub.f32 %v29, %v283
    %v288 = vmax.f32 %v284, 0.0
    %v289 = vmax.f32 %v285, 0.0
    %v290 = vmax.f32 %v286, 0.0
    %v291 = vmax.f32 %v287, 0.0
    %v292 = vadd.f32 %v288, %v289
    %v293 = vadd.f32 %v292, %v290
    %v294 = vadd.f32 %v293, %v291
    %v295 = vrot.slane %v294, 4
    %v296 = vadd.f32 %v294, %v295
    %v297 = vrot.slane %v296, 2
    %v298 = vadd.f32 %v296, %v297
    %v299 = vrot.slane %v298, 1
    %v300 = vadd.f32 %v298, %v299
    %vm301 = vcmp.gt.f32.partialorder %v300, 1.0
    %v302 = vsel %vm301, %v283, %v280
    %v303 = vsel %vm301, %v281, %v283
    %v304 = vadd.f32 %v302, %v303
    %v305 = vmul.f32 %v304, 0.5
    %v306 = vsub.f32 %v26, %v305
    %v307 = vsub.f32 %v27, %v305
    %v308 = vsub.f32 %v28, %v305
    %v309 = vsub.f32 %v29, %v305
    %v310 = vmax.f32 %v306, 0.0
    %v311 = vmax.f32 %v307, 0.0
    %v312 = vmax.f32 %v308, 0.0
    %v313 = vmax.f32 %v309, 0.0
    %v314 = vadd.f32 %v310, %v311
    %v315 = vadd.f32 %v314, %v312
    %v316 = vadd.f32 %v315, %v313
    %v317 = vrot.slane %v316, 4
    %v318 = vadd.f32 %v316, %v317
    %v319 = vrot.slane %v318, 2
    %v320 = vadd.f32 %v318, %v319
    %v321 = vrot.slane %v320, 1
    %v322 = vadd.f32 %v320, %v321
    %vm323 = vcmp.gt.f32.partialorder %v322, 1.0
    %v324 = vsel %vm323, %v305, %v302
    %v325 = vsel %vm323, %v303, %v305
    %v326 = vadd.f32 %v324, %v325
    %v327 = vmul.f32 %v326, 0.5
    %v328 = vsub.f32 %v26, %v327
    %v329 = vsub.f32 %v27, %v327
    %v330 = vsub.f32 %v28, %v327
    %v331 = vsub.f32 %v29, %v327
    %v332 = vmax.f32 %v328, 0.0
    %v333 = vmax.f32 %v329, 0.0
    %v334 = vmax.f32 %v330, 0.0
    %v335 = vmax.f32 %v331, 0.0
    %v336 = vadd.f32 %v332, %v333
    %v337 = vadd.f32 %v336, %v334
    %v338 = vadd.f32 %v337, %v335
    %v339 = vrot.slane %v338, 4
    %v340 = vadd.f32 %v338, %v339
    %v341 = vrot.slane %v340, 2
    %v342 = vadd.f32 %v340, %v341
    %v343 = vrot.slane %v342, 1
    %v344 = vadd.f32 %v342, %v343
    %vm345 = vcmp.gt.f32.partialorder %v344, 1.0
    %v346 = vsel %vm345, %v327, %v324
    %v347 = vlaneseq
    %v348 = vshrl.u32 %v347, 7
    %v349 = vadd.s32 %v348, 8
    %v350 = vadd.s32 %v348, 16
    %v351 = vadd.s32 %v348, 24
    %v352 = vld [vmem:[%s1] sm:$0x1]
    %v353 = vlaneseq
    %v354 = vshrl.u32 %v353, 7
    %v355 = vsub.s32 0, %v354
    %v356 = vrot.slane %v352, %v355
    %vm357 = vcmp.eq.s32.totalorder %v348, %v356
    %vm358 = vcmp.eq.s32.totalorder %v349, %v356
    %vm359 = vcmp.eq.s32.totalorder %v350, %v356
    %vm360 = vcmp.eq.s32.totalorder %v351, %v356
    %v361 = vsel %vm357, %v26, 0.0
    %v362 = vsel %vm358, %v27, 0.0
    %v363 = vsel %vm359, %v28, 0.0
    %v364 = vsel %vm360, %v29, 0.0
    %v365 = vadd.f32 %v361, %v362
    %v366 = vadd.f32 %v365, %v363
    %v367 = vadd.f32 %v366, %v364
    %v368 = vrot.slane %v367, 4
    %v369 = vadd.f32 %v367, %v368
    %v370 = vrot.slane %v369, 2
    %v371 = vadd.f32 %v369, %v370
    %v372 = vrot.slane %v371, 1
    %v373 = vadd.f32 %v371, %v372
    %vm374 = vcmp.gt.f32.partialorder %v26, %v346
    %vm375 = vcmp.gt.f32.partialorder %v27, %v346
    %vm376 = vcmp.gt.f32.partialorder %v28, %v346
    %vm377 = vcmp.gt.f32.partialorder %v29, %v346
    %v378 = vsel %vm374, 1, 0
    %v379 = vsel %vm375, 1, 0
    %v380 = vsel %vm376, 1, 0
    %v381 = vsel %vm377, 1, 0
    %v382 = vcvt.s32.f32 %v378
    %v383 = vcvt.s32.f32 %v379
    %v384 = vcvt.s32.f32 %v380
    %v385 = vcvt.s32.f32 %v381
    %v386 = vadd.f32 %v382, %v383
    %v387 = vadd.f32 %v386, %v384
    %v388 = vadd.f32 %v387, %v385
    %v389 = vrot.slane %v388, 4
    %v390 = vadd.f32 %v388, %v389
    %v391 = vrot.slane %v390, 2
    %v392 = vadd.f32 %v390, %v391
    %v393 = vrot.slane %v392, 1
    %v394 = vadd.f32 %v392, %v393
    %v395 = vsel %vm374, %v26, 0.0
    %v396 = vsel %vm375, %v27, 0.0
    %v397 = vsel %vm376, %v28, 0.0
    %v398 = vsel %vm377, %v29, 0.0
    %v399 = vadd.f32 %v395, %v396
    %v400 = vadd.f32 %v399, %v397
    %v401 = vadd.f32 %v400, %v398
    %v402 = vrot.slane %v401, 4
    %v403 = vadd.f32 %v401, %v402
    %v404 = vrot.slane %v403, 2
    %v405 = vadd.f32 %v403, %v404
    %v406 = vrot.slane %v405, 1
    %v407 = vadd.f32 %v405, %v406
    %v408 = vsub.f32 %v407, 1.0
    %v409 = vrcp.pop %v394
    %v410 = vmul.f32 %v408, %v409
    %vm411 = vcmp.gt.f32.partialorder %v26, %v410
    %vm412 = vcmp.gt.f32.partialorder %v27, %v410
    %vm413 = vcmp.gt.f32.partialorder %v28, %v410
    %vm414 = vcmp.gt.f32.partialorder %v29, %v410
    %v415 = vsel %vm411, 1, 0
    %v416 = vsel %vm412, 1, 0
    %v417 = vsel %vm413, 1, 0
    %v418 = vsel %vm414, 1, 0
    %v419 = vcvt.s32.f32 %v415
    %v420 = vcvt.s32.f32 %v416
    %v421 = vcvt.s32.f32 %v417
    %v422 = vcvt.s32.f32 %v418
    %v423 = vadd.f32 %v419, %v420
    %v424 = vadd.f32 %v423, %v421
    %v425 = vadd.f32 %v424, %v422
    %v426 = vrot.slane %v425, 4
    %v427 = vadd.f32 %v425, %v426
    %v428 = vrot.slane %v427, 2
    %v429 = vadd.f32 %v427, %v428
    %v430 = vrot.slane %v429, 1
    %v431 = vadd.f32 %v429, %v430
    %v432 = vsel %vm411, %v26, 0.0
    %v433 = vsel %vm412, %v27, 0.0
    %v434 = vsel %vm413, %v28, 0.0
    %v435 = vsel %vm414, %v29, 0.0
    %v436 = vadd.f32 %v432, %v433
    %v437 = vadd.f32 %v436, %v434
    %v438 = vadd.f32 %v437, %v435
    %v439 = vrot.slane %v438, 4
    %v440 = vadd.f32 %v438, %v439
    %v441 = vrot.slane %v440, 2
    %v442 = vadd.f32 %v440, %v441
    %v443 = vrot.slane %v442, 1
    %v444 = vadd.f32 %v442, %v443
    %vm445 = vcmp.gt.f32.partialorder %v431, 0.5
    %v446 = vsub.f32 %v444, 1.0
    %v447 = vmax.f32 %v431, 1.0
    %v448 = vrcp.pop %v447
    %v449 = vmul.f32 %v446, %v448
    %v450 = vsel %vm445, %v449, %v410
    %vm451 = vcmp.gt.f32.partialorder %v26, %v450
    %vm452 = vcmp.gt.f32.partialorder %v27, %v450
    %vm453 = vcmp.gt.f32.partialorder %v28, %v450
    %vm454 = vcmp.gt.f32.partialorder %v29, %v450
    %v455 = vsel %vm451, 1, 0
    %v456 = vsel %vm452, 1, 0
    %v457 = vsel %vm453, 1, 0
    %v458 = vsel %vm454, 1, 0
    %v459 = vcvt.s32.f32 %v455
    %v460 = vcvt.s32.f32 %v456
    %v461 = vcvt.s32.f32 %v457
    %v462 = vcvt.s32.f32 %v458
    %v463 = vadd.f32 %v459, %v460
    %v464 = vadd.f32 %v463, %v461
    %v465 = vadd.f32 %v464, %v462
    %v466 = vrot.slane %v465, 4
    %v467 = vadd.f32 %v465, %v466
    %v468 = vrot.slane %v467, 2
    %v469 = vadd.f32 %v467, %v468
    %v470 = vrot.slane %v469, 1
    %v471 = vadd.f32 %v469, %v470
    %v472 = vsel %vm451, %v26, 0.0
    %v473 = vsel %vm452, %v27, 0.0
    %v474 = vsel %vm453, %v28, 0.0
    %v475 = vsel %vm454, %v29, 0.0
    %v476 = vadd.f32 %v472, %v473
    %v477 = vadd.f32 %v476, %v474
    %v478 = vadd.f32 %v477, %v475
    %v479 = vrot.slane %v478, 4
    %v480 = vadd.f32 %v478, %v479
    %v481 = vrot.slane %v480, 2
    %v482 = vadd.f32 %v480, %v481
    %v483 = vrot.slane %v482, 1
    %v484 = vadd.f32 %v482, %v483
    %vm485 = vcmp.gt.f32.partialorder %v471, 0.5
    %v486 = vsub.f32 %v484, 1.0
    %v487 = vmax.f32 %v471, 1.0
    %v488 = vrcp.pop %v487
    %v489 = vmul.f32 %v486, %v488
    %v490 = vsel %vm485, %v489, %v450
    %vm491 = vcmp.gt.f32.partialorder %v26, %v490
    %vm492 = vcmp.gt.f32.partialorder %v27, %v490
    %vm493 = vcmp.gt.f32.partialorder %v28, %v490
    %vm494 = vcmp.gt.f32.partialorder %v29, %v490
    %v495 = vsel %vm491, 1, 0
    %v496 = vsel %vm492, 1, 0
    %v497 = vsel %vm493, 1, 0
    %v498 = vsel %vm494, 1, 0
    %v499 = vcvt.s32.f32 %v495
    %v500 = vcvt.s32.f32 %v496
    %v501 = vcvt.s32.f32 %v497
    %v502 = vcvt.s32.f32 %v498
    %v503 = vadd.f32 %v499, %v500
    %v504 = vadd.f32 %v503, %v501
    %v505 = vadd.f32 %v504, %v502
    %v506 = vrot.slane %v505, 4
    %v507 = vadd.f32 %v505, %v506
    %v508 = vrot.slane %v507, 2
    %v509 = vadd.f32 %v507, %v508
    %v510 = vrot.slane %v509, 1
    %v511 = vadd.f32 %v509, %v510
    %v512 = vsel %vm491, %v26, 0.0
    %v513 = vsel %vm492, %v27, 0.0
    %v514 = vsel %vm493, %v28, 0.0
    %v515 = vsel %vm494, %v29, 0.0
    %v516 = vadd.f32 %v512, %v513
    %v517 = vadd.f32 %v516, %v514
    %v518 = vadd.f32 %v517, %v515
    %v519 = vrot.slane %v518, 4
    %v520 = vadd.f32 %v518, %v519
    %v521 = vrot.slane %v520, 2
    %v522 = vadd.f32 %v520, %v521
    %v523 = vrot.slane %v522, 1
    %v524 = vadd.f32 %v522, %v523
    %vm525 = vcmp.gt.f32.partialorder %v511, 0.5
    %v526 = vsub.f32 %v524, 1.0
    %v527 = vmax.f32 %v511, 1.0
    %v528 = vrcp.pop %v527
    %v529 = vmul.f32 %v526, %v528
    %v530 = vsel %vm525, %v529, %v490
    %vm531 = vcmp.gt.f32.partialorder %v26, %v530
    %vm532 = vcmp.gt.f32.partialorder %v27, %v530
    %vm533 = vcmp.gt.f32.partialorder %v28, %v530
    %vm534 = vcmp.gt.f32.partialorder %v29, %v530
    %v535 = vmul.f32 %v26, %v26
    %v536 = vmul.f32 %v27, %v27
    %v537 = vmul.f32 %v28, %v28
    %v538 = vmul.f32 %v29, %v29
    %v539 = vmul.f32 %v530, %v530
    %v540 = vsub.f32 %v535, %v539
    %v541 = vsub.f32 %v536, %v539
    %v542 = vsub.f32 %v537, %v539
    %v543 = vsub.f32 %v538, %v539
    %v544 = vsel %vm531, %v540, 0.0
    %v545 = vsel %vm532, %v541, 0.0
    %v546 = vsel %vm533, %v542, 0.0
    %v547 = vsel %vm534, %v543, 0.0
    %v548 = vadd.f32 %v544, %v545
    %v549 = vadd.f32 %v548, %v546
    %v550 = vadd.f32 %v549, %v547
    %v551 = vrot.slane %v550, 4
    %v552 = vadd.f32 %v550, %v551
    %v553 = vrot.slane %v552, 2
    %v554 = vadd.f32 %v552, %v553
    %v555 = vrot.slane %v554, 1
    %v556 = vadd.f32 %v554, %v555
    %v557 = vmul.f32 %v556, 0.5
    %v558 = vsub.f32 %v557, %v373
    %v559 = vadd.f32 %v558, 0.5
    %v560 = vmax.f32 %v559, 0.0
    %561 = vst [vmem:[#allocation5] sm:$0x1] %v560
    // Predicated region
    $region14: #{tpu_custom_call.1} parent=1 // pred_check
      _
    $region15: #{tpu_custom_call.1} parent=1 // pred_check_branch
      %563 = sbr.rel (0) target = $region17
    $region16: #{tpu_custom_call.1} parent=1 // pred_region
      %s565 = ssub.s32 16, 16
      %566 = vsyncadd [#allocation4], %s565
      %s568 = sshll.u32 [#allocation5], 4
      %s569 = int_to_ptr.vmem [resolvable:$true] %s568
      %571 = dma.vmem_to_hbm [thread:$0]  %s569, 16, %s2, [#allocation4]
    $region17: #{tpu_custom_call.1} parent=1 // pred_fallthru
      _
    // Predicated region
    $region18: #{tpu_custom_call.1} parent=1 // pred_check
      _
    $region19: #{tpu_custom_call.1} parent=1 // pred_check_branch
      %573 = sbr.rel (0) target = $region21
    $region20: #{tpu_custom_call.1} parent=1 // pred_region
      %574 = dma.done [#allocation4], 16
    $region21: #{tpu_custom_call.1} parent=1 // pred_fallthru
      _
    %575 = vsyncpa [#allocation3], 1
    %576 = vsyncpa [#allocation4], 1

</llo_original>
